<compile_context>
chip_gen: v7x
topology: tpu7x:2x2x1
jax: 0.10.0
libtpu: 0.0.40
codegen_flags: <defaults>
</compile_context>

<pallas_src>
import jax
import jax.numpy as jnp
from jax.experimental import pallas as pl
from jax.experimental.pallas import tpu as pltpu


LANES = 1024                 # lane-dense slab width (multiple of 128)
TILE_ROWS = 1024             # rows per grid step (multiple of 8) -> 4 MiB f32 block
SLAB_ALIGN = 8 * LANES       # smallest aligned chunk: one (8, LANES) slab = 8192 elems


def _linear_kernel(x_ref, w_ref, b_ref, o_ref):
    # x_ref: (tile_rows, LANES) VMEM tile of the lane-dense batch slab.
    # w_ref, b_ref: (1,) f32 SMEM scalars.
    w = w_ref[0]
    b = b_ref[0]
    # Single VPU multiply-add, full-width unmasked stores.
    o_ref[...] = (x_ref[...] * w + b).astype(o_ref.dtype)


def _linear_slab(slab, w1d, b1d):
    """Run y = x*w + b over a (rows, LANES) lane-dense slab, rows % 8 == 0."""
    rows, lanes = slab.shape

    tile_rows = min(TILE_ROWS, rows)
    if tile_rows == rows and rows >= 16:
        # Single-tile case: split into >= 2 grid steps so the "parallel"
        # dimension can be sharded across both v7x TensorCores.
        tile_rows = max(8, (rows // 16) * 8)
    grid = (pl.cdiv(rows, tile_rows),)   # ragged last block handled by Pallas

    return pl.pallas_call(
        _linear_kernel,
        out_shape=jax.ShapeDtypeStruct((rows, lanes), slab.dtype),
        grid=grid,
        in_specs=[
            pl.BlockSpec((tile_rows, lanes), lambda i: (i, 0)),
            pl.BlockSpec(memory_space=pltpu.MemorySpace.SMEM),
            pl.BlockSpec(memory_space=pltpu.MemorySpace.SMEM),
        ],
        out_specs=pl.BlockSpec((tile_rows, lanes), lambda i: (i, 0)),
        compiler_params=pltpu.CompilerParams(
            dimension_semantics=("parallel",),
            # 4 MiB block, double-buffered in + out = 16 MiB; 32 MiB limit
            # gives headroom on v5e (16 MiB scoped default) and fits v7x's
            # 64 MiB physical VMEM per TensorCore.
            vmem_limit_bytes=32 * 1024 * 1024,
        ),
    )(slab, w1d, b1d)


@jax.jit
def linear_forward(x, weight, bias):
    """Exact Linear(1, 1) forward: x (B, 1) -> (B, 1)."""
    B = x.shape[0]
    dtype = x.dtype

    # Keep parameters as f32 on the 32-bit SMEM scalar path.
    w1d = weight.reshape(1).astype(jnp.float32)
    b1d = bias.reshape(1).astype(jnp.float32)
    w = w1d[0]
    b = b1d[0]

    flat = x.reshape(-1)                     # in_features == 1
    n = flat.shape[0]
    n_main = (n // SLAB_ALIGN) * SLAB_ALIGN  # static (trace-time) alignment split

    parts = []
    if n_main > 0:
        # Aligned prefix: free-bitcast reshape into a lane-dense (rows, LANES)
        # slab, streamed through the Pallas kernel. No padding, no slicing.
        slab = flat[:n_main].reshape(n_main // LANES, LANES)
        parts.append(_linear_slab(slab, w1d, b1d).reshape(-1))
    if n_main < n:
        # Ragged tail (< 8192 elements) — cheaper as a fused plain-jnp op
        # than padding the whole array for the kernel.
        tail = flat[n_main:]
        parts.append((tail.astype(jnp.float32) * w + b).astype(dtype))

    y = parts[0] if len(parts) == 1 else jnp.concatenate(parts)
    return y.reshape(B, 1)


if __name__ == "__main__":
    key = jax.random.PRNGKey(0)
    kw, kb, k1, k2, k3 = jax.random.split(key, 5)

    # Deterministic synthetic parameters (shapes from nn.Linear(1, 1)).
    weight = jax.random.normal(kw, (1, 1), dtype=jnp.float32)
    bias = jax.random.normal(kb, (1,), dtype=jnp.float32)

    def reference(xv):
        return xv @ weight.T + bias

    # 1) Aligned fast path: batch = 4 slabs -> Pallas kernel, 2 grid steps.
    batch1 = 4 * SLAB_ALIGN  # 32768 scalars (128 KiB)
    x1 = jax.random.normal(k1, (batch1, 1), dtype=jnp.float32)
    y1 = jax.block_until_ready(linear_forward(x1, weight, bias))
    assert y1.shape == (batch1, 1)
    assert jnp.allclose(y1, reference(x1), atol=1e-6, rtol=1e-6)

    # 2) Unaligned batch: aligned prefix via the kernel + small jnp tail.
    batch2 = 20000
    x2 = jax.random.normal(k2, (batch2, 1), dtype=jnp.float32)
    y2 = jax.block_until_ready(linear_forward(x2, weight, bias))
    assert y2.shape == (batch2, 1)
    assert jnp.allclose(y2, reference(x2), atol=1e-6, rtol=1e-6)

    # 3) Tiny batch (matches the Lecture_05 setup): pure-jnp fallback path.
    batch3 = 8
    x3 = jax.random.normal(k3, (batch3, 1), dtype=jnp.float32)
    y3 = jax.block_until_ready(linear_forward(x3, weight, bias))
    assert y3.shape == (batch3, 1)
    assert jnp.allclose(y3, reference(x3), atol=1e-6, rtol=1e-6)

    print("KERNEL_OK")
</pallas_src>

<mosaic_0001>
module attributes {stable_mosaic.version = 11 : i64} {
  func.func @_linear_kernel(%arg0: i32, %arg1: memref<16x1024xf32, #tpu.memory_space<vmem>>, %arg2: memref<1xf32, #tpu.memory_space<smem>>, %arg3: memref<1xf32, #tpu.memory_space<smem>>, %arg4: memref<16x1024xf32, #tpu.memory_space<vmem>>) attributes {dimension_semantics = [#tpu.dimension_semantics<parallel>], iteration_bounds = array<i64: 2>, scalar_prefetch = 0 : i64, scratch_operands = 0 : i64, tpu.core_type = #tpu.core_type<tc>, window_params = [{transform_indices = @transform_0, window_bounds = array<i64: 16, 1024>}, {transform_indices = @transform_1, window_bounds = array<i64: 1>}, {transform_indices = @transform_2, window_bounds = array<i64: 1>}, {transform_indices = @transform_3, window_bounds = array<i64: 16, 1024>}]} {
    %c0 = arith.constant 0 : index
    %0 = memref.load %arg2[%c0] : memref<1xf32, #tpu.memory_space<smem>>
    %c0_0 = arith.constant 0 : index
    %1 = memref.load %arg3[%c0_0] : memref<1xf32, #tpu.memory_space<smem>>
    %c0_1 = arith.constant 0 : index
    %c0_2 = arith.constant 0 : index
    %2 = vector.load %arg1[%c0_1, %c0_2] : memref<16x1024xf32, #tpu.memory_space<vmem>>, vector<16x1024xf32>
    %3 = vector.broadcast %0 : f32 to vector<16x1024xf32>
    %4 = arith.mulf %2, %3 : vector<16x1024xf32>
    %5 = vector.broadcast %1 : f32 to vector<16x1024xf32>
    %6 = arith.addf %4, %5 : vector<16x1024xf32>
    %c0_3 = arith.constant 0 : index
    %c0_4 = arith.constant 0 : index
    %7 = vector.load %arg4[%c0_3, %c0_4] : memref<16x1024xf32, #tpu.memory_space<vmem>>, vector<16x1024xf32>
    tpu.vector_store %arg4[%c0_3, %c0_4], %6 {strides = array<i32>} : memref<16x1024xf32, #tpu.memory_space<vmem>>, vector<16x1024xf32>,
    return
  }
  func.func @transform_0(%arg0: i32) -> (i32, i32) {
    %c0_i32 = arith.constant 0 : i32
    %c0_i32_0 = arith.constant 0 : i32
    return %arg0, %c0_i32 : i32, i32
  }
  func.func @transform_1(%arg0: i32) -> i32 {
    %c0_i32 = arith.constant 0 : i32
    %c0_i32_0 = arith.constant 0 : i32
    return %c0_i32 : i32
  }
  func.func @transform_2(%arg0: i32) -> i32 {
    %c0_i32 = arith.constant 0 : i32
    %c0_i32_0 = arith.constant 0 : i32
    return %c0_i32 : i32
  }
  func.func @transform_3(%arg0: i32) -> (i32, i32) {
    %c0_i32 = arith.constant 0 : i32
    %c0_i32_0 = arith.constant 0 : i32
    return %arg0, %c0_i32 : i32, i32
  }
}

</mosaic_0001>

<llo_original>
// kernel: linear_forward.1
$region0: #{linear_forward.1}
  #allocation0 [shape = 'u32[]', space=smem, size = 0x4, offset = 0x4, fixed_abs, tag = 'smem constant byte address 0x4 - core index']
  #allocation1 [shape = 'u32[144,128]{1,0:T(1,128)}', space=vmem, size = 0x12000, scoped, tag = 'internal scratch']
  #allocation2 [shape = 'f32[1]{0:T(128)S(6)}', space=smem, size = 0x200, scoped, tag = 'scoped memory for linear_forward.1']
  #allocation3 [shape = 'f32[1]{0:T(128)S(6)}', space=smem, size = 0x200, scoped, tag = 'scoped memory for linear_forward.1']
  %s0 = inlined_call_operand.vmem [shape: f32[32,1024], index: 0, kind: input, shape index: {}]
  %s1 = inlined_call_operand.<no memory space> [shape: f32[1], index: 1, kind: input, shape index: {}]
  %s2 = inlined_call_operand.<no memory space> [shape: f32[1], index: 2, kind: input, shape index: {}]
  %s3 = inlined_call_operand.vmem [shape: f32[32,1024], index: 3, kind: output, shape index: {}]
  %s4 = sld [smem:[#allocation0]]
  $region45: #{linear_forward.1} parent=0
    _
  %s6 = ssub.s32 1, %s4
  %s7 = scalar_select 0, %s6, %s4
  %8 = sst [smem:[#allocation2]] %s1
  %9 = sst [smem:[#allocation3]] %s2
  loop: start=0, step=1, limit=4
  $region2: #{linear_forward.1} parent=0 // loop_pre_header
    _
  $region3: #{linear_forward.1} parent=0 // loop_header
    %s11 = sphi 0, %s15
    %p12 = scmp.ge.s32.totalorder %s11, 4
    %s21 = sphi 0, %s23
    %s24 = sphi 0, %s21
    %s25 = sphi 0, %s24
    %s41 = sphi 0, %s25
    %s45 = sphi 0, %s45
    %s47 = sphi 0, %s45
    %s48 = sphi 0, %s47
    %s62 = sphi 0, %s48
    %s66 = sphi 0, %s66
    %s68 = sphi 0, %s66
    %s69 = sphi 0, %s68
    %s83 = sphi 0, %s69
    %s89 = sphi 0, %s91
    %s92 = sphi 0, %s89
    %s93 = sphi 0, %s92
    %s109 = sphi 0, %s93
  $region4: #{linear_forward.1} parent=0 // loop_header_branch
    %14 = sbr.rel (%p12) target = $region8
  $region5: #{linear_forward.1} parent=0 // loop_body
    %s16 = ssub.s32 %s11, 1
    %s17 = ssub.s32 %s11, 2
    %s18 = sadd.s32 %s11, 1
    %s19 = ssub.s32 %s11, %s18
    %p20 = scmp.eq.s32.totalorder %s19, 0
    %s22 = sadd.s32 %s21, 1
    %s23 = scalar_select %p20, %s21, %s22
    %p26 = pneg %p20
    %p27 = scmp.eq.s32.totalorder %s11, 1
    %p28 = por %p26, %p27
    %p29 = scmp.ne.s32.totalorder %s21, %s24
    %p30 = scmp.eq.s32.totalorder %s11, 0
    %p31 = por %p29, %p30
    %p32 = scmp.ne.s32.totalorder %s21, %s24
    %p33 = scmp.eq.s32.totalorder %s16, 1
    %p34 = por %p32, %p33
    %p35 = scmp.ne.s32.totalorder %s24, %s25
    %p36 = scmp.eq.s32.totalorder %s16, 0
    %p37 = por %p35, %p36
    %p38 = scmp.ne.s32.totalorder %s24, %s25
    %p39 = scmp.eq.s32.totalorder %s17, 1
    %p40 = por %p38, %p39
    %p42 = scmp.ne.s32.totalorder %s25, %s41
    %p43 = scmp.eq.s32.totalorder %s17, 0
    %p44 = por %p42, %p43
    %s46 = sadd.s32 %s45, 1
    %p49 = scmp.eq.s32.totalorder %s11, 1
    %p50 = scmp.ne.s32.totalorder %s45, %s47
    %p51 = scmp.eq.s32.totalorder %s11, 0
    %p52 = por %p50, %p51
    %p53 = scmp.ne.s32.totalorder %s45, %s47
    %p54 = scmp.eq.s32.totalorder %s16, 1
    %p55 = por %p53, %p54
    %p56 = scmp.ne.s32.totalorder %s47, %s48
    %p57 = scmp.eq.s32.totalorder %s16, 0
    %p58 = por %p56, %p57
    %p59 = scmp.ne.s32.totalorder %s47, %s48
    %p60 = scmp.eq.s32.totalorder %s17, 1
    %p61 = por %p59, %p60
    %p63 = scmp.ne.s32.totalorder %s48, %s62
    %p64 = scmp.eq.s32.totalorder %s17, 0
    %p65 = por %p63, %p64
    %s67 = sadd.s32 %s66, 1
    %p70 = scmp.eq.s32.totalorder %s11, 1
    %p71 = scmp.ne.s32.totalorder %s66, %s68
    %p72 = scmp.eq.s32.totalorder %s11, 0
    %p73 = por %p71, %p72
    %p74 = scmp.ne.s32.totalorder %s66, %s68
    %p75 = scmp.eq.s32.totalorder %s16, 1
    %p76 = por %p74, %p75
    %p77 = scmp.ne.s32.totalorder %s68, %s69
    %p78 = scmp.eq.s32.totalorder %s16, 0
    %p79 = por %p77, %p78
    %p80 = scmp.ne.s32.totalorder %s68, %s69
    %p81 = scmp.eq.s32.totalorder %s17, 1
    %p82 = por %p80, %p81
    %p84 = scmp.ne.s32.totalorder %s69, %s83
    %p85 = scmp.eq.s32.totalorder %s17, 0
    %p86 = por %p84, %p85
    %s87 = ssub.s32 %s11, %s18
    %p88 = scmp.eq.s32.totalorder %s87, 0
    %s90 = sadd.s32 %s89, 1
    %s91 = scalar_select %p88, %s89, %s90
    %p94 = pneg %p88
    %p95 = scmp.eq.s32.totalorder %s11, 1
    %p96 = por %p94, %p95
    %p97 = scmp.ne.s32.totalorder %s89, %s92
    %p98 = scmp.eq.s32.totalorder %s11, 0
    %p99 = por %p97, %p98
    %p100 = scmp.ne.s32.totalorder %s89, %s92
    %p101 = scmp.eq.s32.totalorder %s16, 1
    %p102 = por %p100, %p101
    %p103 = scmp.ne.s32.totalorder %s92, %s93
    %p104 = scmp.eq.s32.totalorder %s16, 0
    %p105 = por %p103, %p104
    %p106 = scmp.ne.s32.totalorder %s92, %s93
    %p107 = scmp.eq.s32.totalorder %s17, 1
    %p108 = por %p106, %p107
    %p110 = scmp.ne.s32.totalorder %s93, %s109
    %p111 = scmp.eq.s32.totalorder %s17, 0
    %p112 = por %p110, %p111
    %p113 = scmp.le.s32.totalorder 1, %s11
    %p114 = scmp.lt.s32.totalorder %s11, 3
    %p115 = pnand %p113, %p114
    %p116 = pneg %p115
    // Predicated region
    $region9: #{linear_forward.1} parent=5 // pred_check
      _
    $region10: #{linear_forward.1} parent=5 // pred_check_branch
      %118 = sbr.rel (%p115) target = $region12
    $region11: #{linear_forward.1} parent=5 // pred_region
      %s119 = ssub.s32 %s11, 1
      // Predicated region
      $region13: #{linear_forward.1} parent=11 // pred_check
        %p120 = pneg %p58
      $region14: #{linear_forward.1} parent=11 // pred_check_branch
        %122 = sbr.rel (%p120) target = $region16
      $region15: #{linear_forward.1} parent=11 // pred_region
        _
      $region16: #{linear_forward.1} parent=11 // pred_fallthru
        _
      // Predicated region
      $region17: #{linear_forward.1} parent=11 // pred_check
        %p123 = pneg %p79
      $region18: #{linear_forward.1} parent=11 // pred_check_branch
        %125 = sbr.rel (%p123) target = $region20
      $region19: #{linear_forward.1} parent=11 // pred_region
        _
      $region20: #{linear_forward.1} parent=11 // pred_fallthru
        _
    $region12: #{linear_forward.1} parent=5 // pred_fallthru
      _
    %p126 = scmp.lt.s32.totalorder %s11, 2
    // Predicated region
    $region21: #{linear_forward.1} parent=5 // pred_check
      %p127 = pneg %p126
    $region22: #{linear_forward.1} parent=5 // pred_check_branch
      %129 = sbr.rel (%p127) target = $region24
    $region23: #{linear_forward.1} parent=5 // pred_region
      // Predicated region
      $region25: #{linear_forward.1} parent=23 // pred_check
        %p130 = pneg %p31
      $region26: #{linear_forward.1} parent=23 // pred_check_branch
        %132 = sbr.rel (%p130) target = $region28
      $region27: #{linear_forward.1} parent=23 // pred_region
        %s133 = smul.u32 2, %s11
        %p134 = scmp.lt.s32.totalorder %s133, 3
        %s135 = scalar_select %p134, %s133, 3
        %s136 = smul.addr %s135, 8
        %s137 = smul.addr %s136, 8
        %s138 = scalar_lea.vmem %s0, %s137
        %s139 = smul.u32 2, %s11
      $region28: #{linear_forward.1} parent=23 // pred_fallthru
        _
    $region24: #{linear_forward.1} parent=5 // pred_fallthru
      _
    %p140 = scmp.le.s32.totalorder 1, %s11
    %p141 = scmp.lt.s32.totalorder %s11, 3
    %p142 = pnand %p140, %p141
    %p143 = pneg %p142
    // Predicated region
    $region29: #{linear_forward.1} parent=5 // pred_check
      _
    $region30: #{linear_forward.1} parent=5 // pred_check_branch
      %145 = sbr.rel (%p142) target = $region32
    $region31: #{linear_forward.1} parent=5 // pred_region
      %s146 = ssub.s32 %s11, 1
      %s147 = smul.u32 2, %s16
      %p148 = scmp.lt.s32.totalorder %s147, 3
      %s149 = scalar_select %p148, %s147, 3
      %s150 = smul.addr %s149, 8
      %s151 = smul.addr %s150, 8
      %s152 = scalar_lea.vmem %s0, %s151
      %p153 = pneg %p37
      %p154 = pneg %p34
      %p155 = pneg %p58
      %p156 = pneg %p55
      %p157 = pneg %p79
      %p158 = pneg %p76
      %p159 = pneg %p105
      %p160 = pneg %p102
      %s161 = smul.u32 2, %s16
      %p162 = scmp.lt.s32.totalorder %s161, 3
      %s163 = scalar_select %p162, %s161, 3
      %s164 = smul.addr %s163, 8
      %s165 = smul.addr %s164, 8
      %s166 = scalar_lea.vmem %s3, %s165
      %s167 = smul.u32 2, %s16
      %p168 = scmp.lt.s32.totalorder %s167, 3
      %s169 = scalar_select %p168, %s167, 3
      %s170 = smul.addr %s169, 8
      %s171 = smul.addr %s170, 8
      %s172 = scalar_lea.vmem %s0, %s171
      %s173 = smul.u32 2, %s16
      %s174 = smul.u32 2, %s16
      %p175 = scmp.lt.s32.totalorder %s174, 3
      %s176 = scalar_select %p175, %s174, 3
      %s177 = smul.addr %s176, 8
      %s178 = smul.addr %s177, 8
      %s179 = scalar_lea.vmem %s3, %s178
      %s180 = smul.u32 2, %s16
      %s181 = sld [smem:[#allocation2]]
      %s182 = sld [smem:[#allocation3]]
      %v183 = vld [vmem:[%s172] sm:$0xff]
      %v184 = vld [vmem:[%s172 + $0x8] sm:$0xff]
      %v185 = vld [vmem:[%s172 + $0x10] sm:$0xff]
      %v186 = vld [vmem:[%s172 + $0x18] sm:$0xff]
      %v187 = vld [vmem:[%s172 + $0x20] sm:$0xff]
      %v188 = vld [vmem:[%s172 + $0x28] sm:$0xff]
      %v189 = vld [vmem:[%s172 + $0x30] sm:$0xff]
      %v190 = vld [vmem:[%s172 + $0x38] sm:$0xff]
      %v191 = vld [vmem:[%s172 + $0x40] sm:$0xff]
      %v192 = vld [vmem:[%s172 + $0x48] sm:$0xff]
      %v193 = vld [vmem:[%s172 + $0x50] sm:$0xff]
      %v194 = vld [vmem:[%s172 + $0x58] sm:$0xff]
      %v195 = vld [vmem:[%s172 + $0x60] sm:$0xff]
      %v196 = vld [vmem:[%s172 + $0x68] sm:$0xff]
      %v197 = vld [vmem:[%s172 + $0x70] sm:$0xff]
      %v198 = vld [vmem:[%s172 + $0x78] sm:$0xff]
      %v199 = vstv %s181
      %v200 = vmul.f32 %v183, %v199
      %v201 = vmul.f32 %v184, %v199
      %v202 = vmul.f32 %v185, %v199
      %v203 = vmul.f32 %v186, %v199
      %v204 = vmul.f32 %v187, %v199
      %v205 = vmul.f32 %v188, %v199
      %v206 = vmul.f32 %v189, %v199
      %v207 = vmul.f32 %v190, %v199
      %v208 = vmul.f32 %v191, %v199
      %v209 = vmul.f32 %v192, %v199
      %v210 = vmul.f32 %v193, %v199
      %v211 = vmul.f32 %v194, %v199
      %v212 = vmul.f32 %v195, %v199
      %v213 = vmul.f32 %v196, %v199
      %v214 = vmul.f32 %v197, %v199
      %v215 = vmul.f32 %v198, %v199
      %v216 = vstv %s182
      %v217 = vadd.f32 %v200, %v216
      %v218 = vadd.f32 %v201, %v216
      %v219 = vadd.f32 %v202, %v216
      %v220 = vadd.f32 %v203, %v216
      %v221 = vadd.f32 %v204, %v216
      %v222 = vadd.f32 %v205, %v216
      %v223 = vadd.f32 %v206, %v216
      %v224 = vadd.f32 %v207, %v216
      %v225 = vadd.f32 %v208, %v216
      %v226 = vadd.f32 %v209, %v216
      %v227 = vadd.f32 %v210, %v216
      %v228 = vadd.f32 %v211, %v216
      %v229 = vadd.f32 %v212, %v216
      %v230 = vadd.f32 %v213, %v216
      %v231 = vadd.f32 %v214, %v216
      %v232 = vadd.f32 %v215, %v216
      %233 = vst [vmem:[%s179] sm:$0xff] %v217
      %234 = vst [vmem:[%s179 + $0x8] sm:$0xff] %v218
      %235 = vst [vmem:[%s179 + $0x10] sm:$0xff] %v219
      %236 = vst [vmem:[%s179 + $0x18] sm:$0xff] %v220
      %237 = vst [vmem:[%s179 + $0x20] sm:$0xff] %v221
      %238 = vst [vmem:[%s179 + $0x28] sm:$0xff] %v222
      %239 = vst [vmem:[%s179 + $0x30] sm:$0xff] %v223
      %240 = vst [vmem:[%s179 + $0x38] sm:$0xff] %v224
      %241 = vst [vmem:[%s179 + $0x40] sm:$0xff] %v225
      %242 = vst [vmem:[%s179 + $0x48] sm:$0xff] %v226
      %243 = vst [vmem:[%s179 + $0x50] sm:$0xff] %v227
      %244 = vst [vmem:[%s179 + $0x58] sm:$0xff] %v228
      %245 = vst [vmem:[%s179 + $0x60] sm:$0xff] %v229
      %246 = vst [vmem:[%s179 + $0x68] sm:$0xff] %v230
      %247 = vst [vmem:[%s179 + $0x70] sm:$0xff] %v231
      %248 = vst [vmem:[%s179 + $0x78] sm:$0xff] %v232
      %s249 = smul.u32 2, %s16
      %p250 = scmp.lt.s32.totalorder %s249, 3
      %s251 = scalar_select %p250, %s249, 3
      %s252 = smul.addr %s251, 8
      %s253 = smul.addr %s252, 8
      %s254 = scalar_lea.vmem %s3, %s253
      // Predicated region
      $region33: #{linear_forward.1} parent=31 // pred_check
        %p255 = pneg %p102
      $region34: #{linear_forward.1} parent=31 // pred_check_branch
        %257 = sbr.rel (%p255) target = $region36
      $region35: #{linear_forward.1} parent=31 // pred_region
        %s258 = smul.u32 2, %s16
      $region36: #{linear_forward.1} parent=31 // pred_fallthru
        _
    $region32: #{linear_forward.1} parent=5 // pred_fallthru
      _
    %p259 = scmp.le.s32.totalorder 2, %s11
    // Predicated region
    $region37: #{linear_forward.1} parent=5 // pred_check
      %p260 = pneg %p259
    $region38: #{linear_forward.1} parent=5 // pred_check_branch
      %262 = sbr.rel (%p260) target = $region40
    $region39: #{linear_forward.1} parent=5 // pred_region
      %s263 = ssub.s32 %s11, 2
      // Predicated region
      $region41: #{linear_forward.1} parent=39 // pred_check
        %p264 = pneg %p108
      $region42: #{linear_forward.1} parent=39 // pred_check_branch
        %266 = sbr.rel (%p264) target = $region44
      $region43: #{linear_forward.1} parent=39 // pred_region
        %s267 = smul.u32 2, %s17
        %p268 = scmp.lt.s32.totalorder %s267, 3
        %s269 = scalar_select %p268, %s267, 3
        %s270 = smul.addr %s269, 8
        %s271 = smul.addr %s270, 8
        %s272 = scalar_lea.vmem %s3, %s271
      $region44: #{linear_forward.1} parent=39 // pred_fallthru
        _
    $region40: #{linear_forward.1} parent=5 // pred_fallthru
      _
  $region6: #{linear_forward.1} parent=0 // loop_footer
    %s15 = sadd.s32 1, %s11
  $region7: #{linear_forward.1} parent=0 // loop_footer_branch
    %10 = sbr.rel target = $region3
  $region8: #{linear_forward.1} parent=0 // loop_exit
    _

</llo_original>
